<compile_context>
chip_gen: v6e
topology: v6e:2x2x1
jax: 0.10.0
libtpu: 0.0.40
codegen_flags: <defaults>
</compile_context>

<pallas_src>
import functools

import jax
import jax.numpy as jnp
from jax.experimental import pallas as pl
from jax.experimental.pallas import tpu as pltpu

LANE = 128


def fc_head_kernel(x_ref, w1_ref, b1_ref, w2_ref, b2_ref, out_ref, *, inv_hw):
    # x_ref:  [TB, C, HW]     input dtype (e.g. bf16)
    # w1_ref: [C, D_pad]      bf16
    # b1_ref: [1, D_pad]      f32
    # w2_ref: [D_pad, K_pad]  bf16
    # b2_ref: [1, K_pad]      f32
    # out_ref:[TB, K_pad]     f32

    # AdaptiveAvgPool2d(1): mean over H*W. f32 accumulation on a small per-block tile;
    # the XLU reduce hides under the x DMA.
    pooled = jnp.sum(x_ref[...].astype(jnp.float32), axis=-1) * inv_hw        # [TB, C]

    # fc_end: Linear + ReLU. bf16 MXU operands, f32 accumulation, f32 bias/ReLU.
    h = jnp.dot(pooled.astype(w1_ref.dtype), w1_ref[...],
                preferred_element_type=jnp.float32) + b1_ref[...]
    h = jnp.maximum(h, 0.0)                                                   # [TB, D_pad]

    # fc_out: Linear. Cast h to bf16 for the MXU; keep f32 accumulation + bias.
    out = jnp.dot(h.astype(w2_ref.dtype), w2_ref[...],
                  preferred_element_type=jnp.float32) + b2_ref[...]
    out_ref[...] = out.astype(out_ref.dtype)                                  # [TB, K_pad]


def _round_up(v, m):
    return ((v + m - 1) // m) * m


def fc_head_forward(x_nchw, params, max_length, num_class, *, block_b=128):
    """Reproduces FC_Head.forward: returns (x2, x1)."""
    B, C, H, W = x_nchw.shape
    w1, b1, w2, b2 = params
    D = w1.shape[1]
    K = w2.shape[1]
    assert K == (num_class + 1) * (max_length + 1)

    HW = H * W
    D_pad = _round_up(D, LANE)
    K_pad = _round_up(K, LANE)

    # bf16 weights: half the weight DMA / resident VMEM and native MXU rate.
    # Zero-padding D/K is exact under ReLU / zero rows of w2.
    w1_p = jnp.pad(w1, ((0, 0), (0, D_pad - D))).astype(jnp.bfloat16)          # [C, D_pad]
    b1_p = jnp.pad(b1, (0, D_pad - D)).reshape(1, D_pad).astype(jnp.float32)
    w2_p = jnp.pad(w2, ((0, D_pad - D), (0, K_pad - K))).astype(jnp.bfloat16)  # [D_pad, K_pad]
    b2_p = jnp.pad(b2, (0, K_pad - K)).reshape(1, K_pad).astype(jnp.float32)

    # Pooling happens in-kernel; the wrapper reshape is a free (contiguous) HBM view.
    x3 = x_nchw.reshape(B, C, HW)

    # Batch tiling: one block for tiny B, otherwise aim for >=4 parallel grid steps
    # (deep DMA pipeline; both v7x TensorCores get work). For very large C*HW shrink TB.
    if B <= 8:
        TB = B
    else:
        TB = max(8, min(block_b, _round_up(pl.cdiv(B, 4), 8)))
    grid = (pl.cdiv(B, TB),)

    # True cost: pooling reduce + two small matmuls (no folded-pool inflation).
    x_bytes = B * C * HW * jnp.dtype(x_nchw.dtype).itemsize
    w_bytes = (C * D_pad + D_pad * K_pad) * 2 + (D_pad + K_pad) * 4
    flops = 2 * B * C * D_pad + 2 * B * D_pad * K_pad + B * C * HW
    bytes_accessed = x_bytes + w_bytes + B * K_pad * 4

    kernel = functools.partial(fc_head_kernel, inv_hw=1.0 / HW)

    out_pad = pl.pallas_call(
        kernel,
        out_shape=jax.ShapeDtypeStruct((B, K_pad), jnp.float32),
        grid_spec=pltpu.PrefetchScalarGridSpec(
            num_scalar_prefetch=0,
            grid=grid,
            in_specs=[
                pl.BlockSpec((TB, C, HW), lambda i: (i, 0, 0)),   # x tile (batch grid)
                pl.BlockSpec((C, D_pad), lambda i: (0, 0)),       # resident weights
                pl.BlockSpec((1, D_pad), lambda i: (0, 0)),
                pl.BlockSpec((D_pad, K_pad), lambda i: (0, 0)),
                pl.BlockSpec((1, K_pad), lambda i: (0, 0)),
            ],
            out_specs=pl.BlockSpec((TB, K_pad), lambda i: (i, 0)),
        ),
        compiler_params=pltpu.CompilerParams(
            dimension_semantics=("parallel",),
            vmem_limit_bytes=32 * 1024 * 1024),
        cost_estimate=pl.CostEstimate(
            flops=flops, transcendentals=0, bytes_accessed=bytes_accessed),
    )(x3, w1_p, b1_p, w2_p, b2_p)

    # Output writeback is tiny (B x K_pad f32); keep f32 for downstream precision.
    x1 = out_pad[:, :K] if K_pad != K else out_pad
    x2 = x1.reshape(B, max_length + 1, num_class + 1)
    return x2, x1


def init_params(key, in_channels, out_channels, num_class, max_length):
    """Deterministic Linear-style init (uniform +/- 1/sqrt(fan_in))."""
    k1, k2, k3, k4 = jax.random.split(key, 4)
    K = (num_class + 1) * (max_length + 1)
    bound1 = 1.0 / jnp.sqrt(in_channels)
    bound2 = 1.0 / jnp.sqrt(out_channels)
    w1 = jax.random.uniform(k1, (in_channels, out_channels),
                            jnp.float32, -bound1, bound1)
    b1 = jax.random.uniform(k2, (out_channels,), jnp.float32, -bound1, bound1)
    w2 = jax.random.uniform(k3, (out_channels, K),
                            jnp.float32, -bound2, bound2)
    b2 = jax.random.uniform(k4, (K,), jnp.float32, -bound2, bound2)
    return w1, b1, w2, b2


if __name__ == "__main__":
    # batch=2, in_channels=16, spatial=8x8, out_channels=32,
    # max_length=7, num_class=15 -> fc_out dim K = 8*16 = 128
    B, C, H, W = 2, 16, 8, 8
    out_channels = 32
    max_length = 7
    num_class = 15

    key = jax.random.PRNGKey(0)
    kx, kp = jax.random.split(key)
    # Activations arrive from the backbone in bf16 (halves the dominant x DMA).
    x = jax.random.normal(kx, (B, C, H, W), jnp.float32).astype(jnp.bfloat16)
    params = init_params(kp, C, out_channels, num_class, max_length)

    x2, x1 = fc_head_forward(x, params, max_length, num_class)
    jax.block_until_ready((x2, x1))

    # sanity: pure-JAX f32 reference on the same bf16-rounded input
    x_f32 = x.astype(jnp.float32)
    pooled = jnp.mean(x_f32.reshape(B, C, H * W), axis=-1)
    h = jnp.maximum(pooled @ params[0] + params[1], 0.0)
    ref = h @ params[2] + params[3]

    assert x1.shape == (B, (num_class + 1) * (max_length + 1))
    assert x2.shape == (B, max_length + 1, num_class + 1)
    # bf16 activations + bf16 weights bound accuracy to ~1e-2 relative.
    assert jnp.allclose(x1, ref, atol=2e-2, rtol=2e-2)
    assert jnp.allclose(x2, ref.reshape(B, max_length + 1, num_class + 1),
                        atol=2e-2, rtol=2e-2)

    print("KERNEL_OK")
</pallas_src>

<mosaic_0001>
module attributes {stable_mosaic.version = 11 : i64} {
  func.func @fc_head_kernel(%arg0: i32, %arg1: memref<2x16x64xbf16, #tpu.memory_space<vmem>>, %arg2: memref<16x128xbf16, #tpu.memory_space<vmem>>, %arg3: memref<1x128xf32, #tpu.memory_space<vmem>>, %arg4: memref<128x128xbf16, #tpu.memory_space<vmem>>, %arg5: memref<1x128xf32, #tpu.memory_space<vmem>>, %arg6: memref<2x128xf32, #tpu.memory_space<vmem>>) attributes {dimension_semantics = [#tpu.dimension_semantics<parallel>], iteration_bounds = array<i64: 1>, scalar_prefetch = 0 : i64, scratch_operands = 0 : i64, tpu.core_type = #tpu.core_type<tc>, window_params = [{transform_indices = @transform_0, window_bounds = array<i64: 2, 16, 64>}, {pipeline_mode = #tpu.pipeline_mode<synchronous>, transform_indices = @transform_1, window_bounds = array<i64: 16, 128>}, {pipeline_mode = #tpu.pipeline_mode<synchronous>, transform_indices = @transform_2, window_bounds = array<i64: 1, 128>}, {pipeline_mode = #tpu.pipeline_mode<synchronous>, transform_indices = @transform_3, window_bounds = array<i64: 128, 128>}, {pipeline_mode = #tpu.pipeline_mode<synchronous>, transform_indices = @transform_4, window_bounds = array<i64: 1, 128>}, {transform_indices = @transform_5, window_bounds = array<i64: 2, 128>}]} {
    %c0 = arith.constant 0 : index
    %c0_0 = arith.constant 0 : index
    %c0_1 = arith.constant 0 : index
    %0 = vector.load %arg1[%c0, %c0_0, %c0_1] : memref<2x16x64xbf16, #tpu.memory_space<vmem>>, vector<2x16x64xbf16>
    %1 = arith.extf %0 : vector<2x16x64xbf16> to vector<2x16x64xf32>
    %cst = arith.constant dense<0.000000e+00> : vector<2x16xf32>
    %2 = vector.multi_reduction <add>, %1, %cst [2] : vector<2x16x64xf32> to vector<2x16xf32>
    %cst_2 = arith.constant 1.562500e-02 : f32
    %3 = vector.broadcast %cst_2 : f32 to vector<2x16xf32>
    %4 = arith.mulf %2, %3 : vector<2x16xf32>
    %5 = arith.truncf %4 : vector<2x16xf32> to vector<2x16xbf16>
    %c0_3 = arith.constant 0 : index
    %c0_4 = arith.constant 0 : index
    %6 = vector.load %arg2[%c0_3, %c0_4] : memref<16x128xbf16, #tpu.memory_space<vmem>>, vector<16x128xbf16>
    %cst_5 = arith.constant dense<0.000000e+00> : vector<2x128xf32>
    %7 = tpu.matmul %5, %6, %cst_5 {dimension_numbers = #tpu.dot_dimension_numbers<[1], [0], [0], [1], [0, 0, 1, 1], [], []>} : vector<2x16xbf16>, vector<16x128xbf16>, vector<2x128xf32> -> vector<2x128xf32>
    %c0_6 = arith.constant 0 : index
    %c0_7 = arith.constant 0 : index
    %8 = vector.load %arg3[%c0_6, %c0_7] : memref<1x128xf32, #tpu.memory_space<vmem>>, vector<1x128xf32>
    %9 = vector.broadcast %8 : vector<1x128xf32> to vector<2x128xf32>
    %10 = arith.addf %7, %9 : vector<2x128xf32>
    %cst_8 = arith.constant 0.000000e+00 : f32
    %11 = vector.broadcast %cst_8 : f32 to vector<2x128xf32>
    %12 = arith.maximumf %10, %11 : vector<2x128xf32>
    %13 = arith.truncf %12 : vector<2x128xf32> to vector<2x128xbf16>
    %c0_9 = arith.constant 0 : index
    %c0_10 = arith.constant 0 : index
    %14 = vector.load %arg4[%c0_9, %c0_10] : memref<128x128xbf16, #tpu.memory_space<vmem>>, vector<128x128xbf16>
    %cst_11 = arith.constant dense<0.000000e+00> : vector<2x128xf32>
    %15 = tpu.matmul %13, %14, %cst_11 {dimension_numbers = #tpu.dot_dimension_numbers<[1], [0], [0], [1], [0, 0, 1, 1], [], []>} : vector<2x128xbf16>, vector<128x128xbf16>, vector<2x128xf32> -> vector<2x128xf32>
    %c0_12 = arith.constant 0 : index
    %c0_13 = arith.constant 0 : index
    %16 = vector.load %arg5[%c0_12, %c0_13] : memref<1x128xf32, #tpu.memory_space<vmem>>, vector<1x128xf32>
    %17 = vector.broadcast %16 : vector<1x128xf32> to vector<2x128xf32>
    %18 = arith.addf %15, %17 : vector<2x128xf32>
    %c0_14 = arith.constant 0 : index
    %c0_15 = arith.constant 0 : index
    %19 = vector.load %arg6[%c0_14, %c0_15] : memref<2x128xf32, #tpu.memory_space<vmem>>, vector<2x128xf32>
    tpu.vector_store %arg6[%c0_14, %c0_15], %18 {strides = array<i32>} : memref<2x128xf32, #tpu.memory_space<vmem>>, vector<2x128xf32>,
    return
  }
  func.func @transform_0(%arg0: i32) -> (i32, i32, i32) {
    %c0_i32 = arith.constant 0 : i32
    %c0_i32_0 = arith.constant 0 : i32
    %c0_i32_1 = arith.constant 0 : i32
    return %arg0, %c0_i32, %c0_i32_0 : i32, i32, i32
  }
  func.func @transform_1(%arg0: i32) -> (i32, i32) {
    %c0_i32 = arith.constant 0 : i32
    %c0_i32_0 = arith.constant 0 : i32
    %c0_i32_1 = arith.constant 0 : i32
    return %c0_i32, %c0_i32_0 : i32, i32
  }
  func.func @transform_2(%arg0: i32) -> (i32, i32) {
    %c0_i32 = arith.constant 0 : i32
    %c0_i32_0 = arith.constant 0 : i32
    %c0_i32_1 = arith.constant 0 : i32
    return %c0_i32, %c0_i32_0 : i32, i32
  }
  func.func @transform_3(%arg0: i32) -> (i32, i32) {
    %c0_i32 = arith.constant 0 : i32
    %c0_i32_0 = arith.constant 0 : i32
    %c0_i32_1 = arith.constant 0 : i32
    return %c0_i32, %c0_i32_0 : i32, i32
  }
  func.func @transform_4(%arg0: i32) -> (i32, i32) {
    %c0_i32 = arith.constant 0 : i32
    %c0_i32_0 = arith.constant 0 : i32
    %c0_i32_1 = arith.constant 0 : i32
    return %c0_i32, %c0_i32_0 : i32, i32
  }
  func.func @transform_5(%arg0: i32) -> (i32, i32) {
    %c0_i32 = arith.constant 0 : i32
    %c0_i32_0 = arith.constant 0 : i32
    return %arg0, %c0_i32 : i32, i32
  }
}

</mosaic_0001>

<llo_original>
// kernel: tpu_custom_call.1
$region0: #{tpu_custom_call.1}
  #allocation0 [shape = 'u32[]', space=smem, size = 0x4, offset = 0x4, fixed_abs, tag = 'smem constant byte address 0x4 - core index']
  #allocation1 [shape = 'u32[144,128]{1,0:T(1,128)}', space=vmem, size = 0x12000, scoped, tag = 'internal scratch']
  %s0 = inlined_call_operand.hbm [shape: bf16[2,16,64], index: 0, kind: input, shape index: {}]
  %s1 = inlined_call_operand.hbm [shape: bf16[16,128], index: 1, kind: input, shape index: {}]
  %s2 = inlined_call_operand.vmem [shape: f32[1,128], index: 2, kind: input, shape index: {}]
  %s3 = inlined_call_operand.hbm [shape: bf16[128,128], index: 3, kind: input, shape index: {}]
  %s4 = inlined_call_operand.vmem [shape: f32[1,128], index: 4, kind: input, shape index: {}]
  %s5 = inlined_call_operand.hbm [shape: f32[2,128], index: 5, kind: output, shape index: {}]
  %s6 = sld [smem:[#allocation0]]
  $region42: #{tpu_custom_call.1} parent=0
    _
  %s8 = ssub.s32 1, %s6
  %s9 = scalar_select 0, %s8, %s6
  $region1: #{tpu_custom_call.1} parent=0
    #allocation2 [shape = 'u8[8192]{0}', space=vmem, size = 0x2000, scoped, tag = 'input window, operand 0, single buffered']
    #allocation3 [shape = 's32[1]{0}', space=sflag, size = 0x4, scoped, tag = 'scoped memory for tpu_custom_call.1']
    #allocation4 [shape = 's32[1]{0}', space=sflag, size = 0x4, scoped, tag = 'scoped memory for tpu_custom_call.1']
    #allocation5 [shape = 'u8[4096]{0}', space=vmem, size = 0x1000, scoped, tag = 'input window, operand 1, single buffered']
    #allocation6 [shape = 's32[1]{0}', space=sflag, size = 0x4, scoped, tag = 'scoped memory for tpu_custom_call.1']
    #allocation7 [shape = 'u8[32768]{0}', space=vmem, size = 0x8000, scoped, tag = 'input window, operand 3, single buffered']
    #allocation8 [shape = 'u8[1024]{0}', space=vmem, size = 0x400, scoped, tag = 'output window, operand 0, single buffered']
    %10 = vsyncpa [#allocation3], 0
    %11 = vsyncpa [#allocation6], 0
    %12 = vsyncpa [#allocation4], 0
    // Predicated region
    $region2: #{tpu_custom_call.1} parent=1 // pred_check
      _
    $region3: #{tpu_custom_call.1} parent=1 // pred_check_branch
      %14 = sbr.rel (0) target = $region5
    $region4: #{tpu_custom_call.1} parent=1 // pred_region
      %s16 = ssub.s32 256, 256
      %17 = vsyncadd [#allocation3], %s16
      %s18 = sshll.u32 [#allocation2], 4
      %s19 = int_to_ptr.vmem [resolvable:$true] %s18
      %24 = dma.hbm_to_vmem [thread:$0]  %s0, 256, %s19, [#allocation3], 64, 64, 4
    $region5: #{tpu_custom_call.1} parent=1 // pred_fallthru
      _
    // Predicated region
    $region6: #{tpu_custom_call.1} parent=1 // pred_check
      _
    $region7: #{tpu_custom_call.1} parent=1 // pred_check_branch
      %26 = sbr.rel (0) target = $region9
    $region8: #{tpu_custom_call.1} parent=1 // pred_region
      %s28 = ssub.s32 128, 128
      %29 = vsyncadd [#allocation6], %s28
      %s30 = sshll.u32 [#allocation5], 4
      %s31 = int_to_ptr.vmem [resolvable:$true] %s30
      %36 = dma.hbm_to_vmem [thread:$0]  %s1, 128, %s31, [#allocation6], 64, 64, 4
    $region9: #{tpu_custom_call.1} parent=1 // pred_fallthru
      _
    // Predicated region
    $region10: #{tpu_custom_call.1} parent=1 // pred_check
      _
    $region11: #{tpu_custom_call.1} parent=1 // pred_check_branch
      %38 = sbr.rel (0) target = $region13
    $region12: #{tpu_custom_call.1} parent=1 // pred_region
      _
    $region13: #{tpu_custom_call.1} parent=1 // pred_fallthru
      _
    // Predicated region
    $region14: #{tpu_custom_call.1} parent=1 // pred_check
      _
    $region15: #{tpu_custom_call.1} parent=1 // pred_check_branch
      %40 = sbr.rel (0) target = $region17
    $region16: #{tpu_custom_call.1} parent=1 // pred_region
      %s42 = ssub.s32 1024, 1024
      %43 = vsyncadd [#allocation6], %s42
      %s44 = sshll.u32 [#allocation7], 4
      %s45 = int_to_ptr.vmem [resolvable:$true] %s44
      %50 = dma.hbm_to_vmem [thread:$0]  %s3, 1024, %s45, [#allocation6], 64, 64, 4
    $region17: #{tpu_custom_call.1} parent=1 // pred_fallthru
      _
    // Predicated region
    $region18: #{tpu_custom_call.1} parent=1 // pred_check
      _
    $region19: #{tpu_custom_call.1} parent=1 // pred_check_branch
      %52 = sbr.rel (0) target = $region21
    $region20: #{tpu_custom_call.1} parent=1 // pred_region
      _
    $region21: #{tpu_custom_call.1} parent=1 // pred_fallthru
      _
    // Predicated region
    $region22: #{tpu_custom_call.1} parent=1 // pred_check
      _
    $region23: #{tpu_custom_call.1} parent=1 // pred_check_branch
      %54 = sbr.rel (0) target = $region25
    $region24: #{tpu_custom_call.1} parent=1 // pred_region
      %55 = dma.done [#allocation3], 256
    $region25: #{tpu_custom_call.1} parent=1 // pred_fallthru
      _
    // Predicated region
    $region26: #{tpu_custom_call.1} parent=1 // pred_check
      _
    $region27: #{tpu_custom_call.1} parent=1 // pred_check_branch
      %57 = sbr.rel (0) target = $region29
    $region28: #{tpu_custom_call.1} parent=1 // pred_region
      %58 = dma.done [#allocation6], 128
    $region29: #{tpu_custom_call.1} parent=1 // pred_fallthru
      _
    // Predicated region
    $region30: #{tpu_custom_call.1} parent=1 // pred_check
      _
    $region31: #{tpu_custom_call.1} parent=1 // pred_check_branch
      %60 = sbr.rel (0) target = $region33
    $region32: #{tpu_custom_call.1} parent=1 // pred_region
      %61 = dma.done [#allocation6], 1024
    $region33: #{tpu_custom_call.1} parent=1 // pred_fallthru
      _
    %v63 = vld [vmem:[#allocation2] sm:$0xf]
    %v64 = vld [vmem:[#allocation2 + $0x4] sm:$0xf]
    %v65 = vld [vmem:[#allocation2 + $0x8] sm:$0xf]
    %v66 = vld [vmem:[#allocation2 + $0xc] sm:$0xf]
    %v67 = vunpack.c.l.bf16 %v63
    %v68 = vunpack.c.l.bf16 %v64
    %v69 = vunpack.c.l.bf16 %v65
    %v70 = vunpack.c.l.bf16 %v66
    %vm71 = vcmask 523264
    %v72 = vsel %vm71, %v67, 0.0
    %73 = vadd.xlane.f32.xlu0 %v72
    %v74 = vpop.xlane.xlu0 %73
    %v75 = vsel %vm71, %v68, 0.0
    %76 = vadd.xlane.f32.xlu0 %v75
    %v77 = vpop.xlane.xlu0 %76
    %v78 = vsel %vm71, %v69, 0.0
    %79 = vadd.xlane.f32.xlu0 %v78
    %v80 = vpop.xlane.xlu0 %79
    %v81 = vsel %vm71, %v70, 0.0
    %82 = vadd.xlane.f32.xlu0 %v81
    %v83 = vpop.xlane.xlu0 %82
    %v84 = vmul.f32 %v74, 0.015625
    %v85 = vmul.f32 %v77, 0.015625
    %v86 = vmul.f32 %v80, 0.015625
    %v87 = vmul.f32 %v83, 0.015625
    %v88 = vpack.c.bf16 %v85, %v84
    %v89 = vpack.c.bf16 %v87, %v86
    %v90 = vld [vmem:[#allocation5] sm:$0xf]
    %v91 = vld [vmem:[#allocation5 + $0x4] sm:$0xf]
    %v92 = vld [vmem:[%s2] sm:$0x1]
    %v94 = vlaneseq
    %v95 = vshrl.u32 %v94, 7
    %v96 = vsub.s32 0, %v95
    %v97 = vrot.slane %v92, %v96
    %v101 = vunpack.c.l.b16 %v88
    %v102 = vunpack.c.h.b16 %v88
    %v103 = vunpack.c.l.b16 %v89
    %v104 = vunpack.c.h.b16 %v89
    %v105 = vlaneseq
    %v106 = vand.u32 %v105, 127
    %v107 = vlaneseq
    %v108 = vshrl.u32 %v107, 7
    %v109 = vsub.s32 %v106, %v108
    %v110 = vrot.slane %v101, %v109
    %v111 = vadd.s32 %v106, 4294967288
    %v112 = vlaneseq
    %v113 = vshrl.u32 %v112, 7
    %v114 = vsub.s32 %v111, %v113
    %v115 = vrot.slane %v102, %v114
    %vm116 = vcmask 130112
    %v117 = vsel %vm116, %v115, %v110
    %v118 = vlaneseq
    %v119 = vshrl.u32 %v118, 7
    %v120 = vsub.s32 %v106, %v119
    %v121 = vrot.slane %v103, %v120
    %v122 = vlaneseq
    %v123 = vshrl.u32 %v122, 7
    %v124 = vsub.s32 %v111, %v123
    %v125 = vrot.slane %v104, %v124
    %v126 = vsel %vm116, %v125, %v121
    %vm127 = vcmask 1041409
    %v128 = vsel %vm127, %v126, %v117
    %v129 = vpack.c.b16 %v128, %v128
    %v132 = vunpack.c.l.b16 %v90
    %v133 = vunpack.c.l.b16 %v91
    %v134 = vpack.c.b16 %v133, %v132
    %vm136 = vcmask 130048
    %v138 = vsel %vm136, %v129, 0
    %140 = vmatprep.subr.bf16.mxu0 0
    %141 = vmatpush1.bf16.msra.mxu0 0
    %142 = vmatprep.subr.bf16.mxu0 0
    %143 = vmatpush1.bf16.msra.mxu0 0
    %144 = vmatprep.subr.bf16.mxu0 0
    %145 = vmatpush1.bf16.msra.mxu0 0
    %146 = vmatprep.subr.bf16.mxu0 0
    %147 = vmatpush1.bf16.msra.mxu0 0
    %148 = vmatprep.subr.bf16.mxu0 0
    %149 = vmatpush1.bf16.msra.mxu0 0
    %150 = vmatprep.subr.bf16.mxu0 0
    %151 = vmatpush1.bf16.msra.mxu0 0
    %152 = vmatprep.subr.bf16.mxu0 0
    %153 = vmatpush1.bf16.msra.mxu0 0
    %154 = vmatprep.subr.bf16.mxu0 0
    %155 = vmatpush1.bf16.msra.mxu0 %v134
    %156 = vmatprep.subr.bf16.mxu0 0
    %157 = vmatpush2.bf16.msra.mxu0 0
    %158 = vmatprep.subr.bf16.mxu0 0
    %159 = vmatpush2.bf16.msra.mxu0 0
    %160 = vmatprep.subr.bf16.mxu0 0
    %161 = vmatpush2.bf16.msra.mxu0 0
    %162 = vmatprep.subr.bf16.mxu0 0
    %163 = vmatpush2.bf16.msra.mxu0 0
    %164 = vmatprep.subr.bf16.mxu0 0
    %165 = vmatpush2.bf16.msra.mxu0 0
    %166 = vmatprep.subr.bf16.mxu0 0
    %167 = vmatpush2.bf16.msra.mxu0 0
    %168 = vmatprep.subr.bf16.mxu0 0
    %169 = vmatpush2.bf16.msra.mxu0 0
    %170 = vmatprep.subr.bf16.mxu0 0
    %171 = vmatpush2.bf16.msra.mxu0 0
    %172 = vmatprep.mubr.bf16.mxu0 0
    %173 = vmatmul.mubr.bf16.gmra.mxu0 %v138
    %v174 = vpop.f32.mrf.mxu0
    %v175 = vadd.f32 %v97, %v174
    %v176 = vpop.f32.mrf.mxu0
    %v177 = vpop.f32.mrf.mxu0
    %v178 = vpop.f32.mrf.mxu0
    %179 = vdwg.mxu0
    %v180 = vmax.f32 %v175, 0.0
    %v181 = vpack.c.bf16 %v180, %v180
    %v182 = vld [vmem:[#allocation7] sm:$0xf]
    %v183 = vld [vmem:[#allocation7 + $0x4] sm:$0xf]
    %v184 = vld [vmem:[#allocation7 + $0x8] sm:$0xf]
    %v185 = vld [vmem:[#allocation7 + $0xc] sm:$0xf]
    %v186 = vld [vmem:[#allocation7 + $0x10] sm:$0xf]
    %v187 = vld [vmem:[#allocation7 + $0x14] sm:$0xf]
    %v188 = vld [vmem:[#allocation7 + $0x18] sm:$0xf]
    %v189 = vld [vmem:[#allocation7 + $0x1c] sm:$0xf]
    %v190 = vld [vmem:[#allocation7 + $0x20] sm:$0xf]
    %v191 = vld [vmem:[#allocation7 + $0x24] sm:$0xf]
    %v192 = vld [vmem:[#allocation7 + $0x28] sm:$0xf]
    %v193 = vld [vmem:[#allocation7 + $0x2c] sm:$0xf]
    %v194 = vld [vmem:[#allocation7 + $0x30] sm:$0xf]
    %v195 = vld [vmem:[#allocation7 + $0x34] sm:$0xf]
    %v196 = vld [vmem:[#allocation7 + $0x38] sm:$0xf]
    %v197 = vld [vmem:[#allocation7 + $0x3c] sm:$0xf]
    %v198 = vld [vmem:[%s4] sm:$0x1]
    %v200 = vlaneseq
    %v201 = vshrl.u32 %v200, 7
    %v202 = vsub.s32 0, %v201
    %v203 = vrot.slane %v198, %v202
    %v221 = vunpack.c.l.b16 %v182
    %v222 = vunpack.c.l.b16 %v183
    %v223 = vunpack.c.l.b16 %v184
    %v224 = vunpack.c.l.b16 %v185
    %v225 = vunpack.c.l.b16 %v186
    %v226 = vunpack.c.l.b16 %v187
    %v227 = vunpack.c.l.b16 %v188
    %v228 = vunpack.c.l.b16 %v189
    %v229 = vunpack.c.l.b16 %v190
    %v230 = vunpack.c.l.b16 %v191
    %v231 = vunpack.c.l.b16 %v192
    %v232 = vunpack.c.l.b16 %v193
    %v233 = vunpack.c.l.b16 %v194
    %v234 = vunpack.c.l.b16 %v195
    %v235 = vunpack.c.l.b16 %v196
    %v236 = vunpack.c.l.b16 %v197
    %v237 = vpack.c.b16 %v222, %v221
    %v238 = vpack.c.b16 %v224, %v223
    %v239 = vpack.c.b16 %v226, %v225
    %v240 = vpack.c.b16 %v228, %v227
    %v241 = vpack.c.b16 %v230, %v229
    %v242 = vpack.c.b16 %v232, %v231
    %v243 = vpack.c.b16 %v234, %v233
    %v244 = vpack.c.b16 %v236, %v235
    %253 = vmatprep.subr.bf16.mxu0 0
    %254 = vmatpush1.bf16.msra.mxu0 %v244
    %255 = vmatprep.subr.bf16.mxu0 0
    %256 = vmatpush1.bf16.msra.mxu0 %v243
    %257 = vmatprep.subr.bf16.mxu0 0
    %258 = vmatpush1.bf16.msra.mxu0 %v242
    %259 = vmatprep.subr.bf16.mxu0 0
    %260 = vmatpush1.bf16.msra.mxu0 %v241
    %261 = vmatprep.subr.bf16.mxu0 0
    %262 = vmatpush1.bf16.msra.mxu0 %v240
    %263 = vmatprep.subr.bf16.mxu0 0
    %264 = vmatpush1.bf16.msra.mxu0 %v239
    %265 = vmatprep.subr.bf16.mxu0 0
    %266 = vmatpush1.bf16.msra.mxu0 %v238
    %267 = vmatprep.subr.bf16.mxu0 0
    %268 = vmatpush1.bf16.msra.mxu0 %v237
    %269 = vmatprep.subr.bf16.mxu0 0
    %270 = vmatpush2.bf16.msra.mxu0 0
    %271 = vmatprep.subr.bf16.mxu0 0
    %272 = vmatpush2.bf16.msra.mxu0 0
    %273 = vmatprep.subr.bf16.mxu0 0
    %274 = vmatpush2.bf16.msra.mxu0 0
    %275 = vmatprep.subr.bf16.mxu0 0
    %276 = vmatpush2.bf16.msra.mxu0 0
    %277 = vmatprep.subr.bf16.mxu0 0
    %278 = vmatpush2.bf16.msra.mxu0 0
    %279 = vmatprep.subr.bf16.mxu0 0
    %280 = vmatpush2.bf16.msra.mxu0 0
    %281 = vmatprep.subr.bf16.mxu0 0
    %282 = vmatpush2.bf16.msra.mxu0 0
    %283 = vmatprep.subr.bf16.mxu0 0
    %284 = vmatpush2.bf16.msra.mxu0 0
    %285 = vmatprep.mubr.bf16.mxu0 0
    %286 = vmatmul.mubr.bf16.gmra.mxu0 %v181
    %v287 = vpop.f32.mrf.mxu0
    %v288 = vadd.f32 %v203, %v287
    %v289 = vpop.f32.mrf.mxu0
    %v290 = vpop.f32.mrf.mxu0
    %v291 = vpop.f32.mrf.mxu0
    %292 = vdwg.mxu0
    %293 = vst [vmem:[#allocation8] sm:$0x3] %v288
    // Predicated region
    $region34: #{tpu_custom_call.1} parent=1 // pred_check
      _
    $region35: #{tpu_custom_call.1} parent=1 // pred_check_branch
      %295 = sbr.rel (0) target = $region37
    $region36: #{tpu_custom_call.1} parent=1 // pred_region
      %s297 = ssub.s32 32, 32
      %298 = vsyncadd [#allocation4], %s297
      %s300 = sshll.u32 [#allocation8], 4
      %s301 = int_to_ptr.vmem [resolvable:$true] %s300
      %303 = dma.vmem_to_hbm [thread:$0]  %s301, 32, %s5, [#allocation4]
    $region37: #{tpu_custom_call.1} parent=1 // pred_fallthru
      _
    // Predicated region
    $region38: #{tpu_custom_call.1} parent=1 // pred_check
      _
    $region39: #{tpu_custom_call.1} parent=1 // pred_check_branch
      %305 = sbr.rel (0) target = $region41
    $region40: #{tpu_custom_call.1} parent=1 // pred_region
      %306 = dma.done [#allocation4], 32
    $region41: #{tpu_custom_call.1} parent=1 // pred_fallthru
      _
    %307 = vsyncpa [#allocation3], 1
    %308 = vsyncpa [#allocation6], 1
    %309 = vsyncpa [#allocation4], 1

</llo_original>
